<compile_context>
chip_gen: v7x
topology: tpu7x:2x2x1
jax: 0.10.0
libtpu: 0.0.40
codegen_flags: <defaults>
</compile_context>

<pallas_src>
import jax
import jax.numpy as jnp
from jax import lax
from jax.experimental import pallas as pl
from jax.experimental.pallas import tpu as pltpu


def _linear_kernel(x_ref, w_ref, b_ref, o_ref, acc_ref):
    """One (tm, tn) output tile; K streamed along the innermost grid axis.

    x_ref  : (tm, tk)  activation tile (compute dtype, e.g. bf16)
    w_ref  : (tn, tk)  weight tile, native PyTorch [out, in] layout
    b_ref  : (1, tn)   bias tile (f32)
    o_ref  : (tm, tn)  output tile
    acc_ref: (tm, tn)  f32 VMEM accumulator (persists across k steps)
    """
    k = pl.program_id(2)

    @pl.when(k == 0)
    def _init():
        acc_ref[...] = jnp.zeros_like(acc_ref)

    # NT matmul: contract the last dim of both operands. Mosaic feeds the
    # "transposed" operand to the MXU directly; no weight.T in the wrapper.
    acc_ref[...] += lax.dot_general(
        x_ref[...], w_ref[...],
        dimension_numbers=(((1,), (1,)), ((), ())),
        preferred_element_type=jnp.float32,
    )

    @pl.when(k == pl.num_programs(2) - 1)
    def _finalize():
        o_ref[...] = (acc_ref[...] + b_ref[...]).astype(o_ref.dtype)


def prepare_decoder_params(weight, bias, compute_dtype=jnp.bfloat16):
    """One-time (model-load) parameter prep — NOT on the per-call hot path.

    * weight cast to the MXU compute dtype (bf16 halves HBM weight traffic
      and enables the fast single-pass MXU path).
    * bias kept in f32 (added once on the f32 accumulator), reshaped to 2-D
      for TPU lane layout.
    No padding, no transpose: D_out stays unpadded (ragged final N tile is
    masked by Pallas) and the NT contraction uses the native [out, in] layout.
    """
    return weight.astype(compute_dtype), bias.astype(jnp.float32).reshape(1, -1)


def _pick_tk(d_in, tk_max):
    if d_in <= tk_max:
        return d_in
    # Largest multiple of 128 <= tk_max that divides D_in exactly, so the K
    # tiles cover D_in with no ragged tile.
    tk = (tk_max // 128) * 128
    while tk >= 128:
        if d_in % tk == 0:
            return tk
        tk -= 128
    # TODO(synk): D_in has no multiple-of-128 divisor <= tk_max; fall back to a
    # single resident K block (correct, but larger VMEM footprint).
    return d_in


def multimodal_decoder(x, weight_c, bias2d, *, tm_max=256, tn_max=512,
                       tk_max=512, out_dtype=None):
    """y = x @ weight_c.T + bias.

    x        : [B, D_in]        activations (any float dtype)
    weight_c : [D_out, D_in]    weight, already in compute dtype (see
                                prepare_decoder_params), PyTorch layout
    bias2d   : [1, D_out]       f32 bias
    Tile caps are per-generation tunables (e.g. tn_max=256 on v5e,
    tn_max=1024 on v6e when compute-bound); defaults fit every generation's
    scoped-VMEM default with bf16 tiles.
    """
    B, D_in = x.shape
    D_out, d_in_w = weight_c.shape
    assert d_in_w == D_in
    assert bias2d.shape == (1, D_out)

    out_dtype = x.dtype if out_dtype is None else out_dtype

    # Cheap per-call activation cast (B*D_in bytes) onto the bf16 MXU path.
    x_c = x.astype(weight_c.dtype)

    tm = B if B <= tm_max else tm_max          # sublane axis: mult of 8 or full
    tn = D_out if D_out <= tn_max else tn_max  # lane axis: mult of 128 or full
    tk = _pick_tk(D_in, tk_max)

    nj = pl.cdiv(D_out, tn)   # N blocks (outer)
    ni = pl.cdiv(B, tm)       # M blocks (middle)
    nk = pl.cdiv(D_in, tk)    # K blocks (inner, reduction)

    cost = pl.CostEstimate(
        flops=2 * B * D_in * D_out,
        transcendentals=0,
        bytes_accessed=(x_c.size * x_c.dtype.itemsize
                        + weight_c.size * weight_c.dtype.itemsize
                        + bias2d.size * 4
                        + B * D_out * jnp.dtype(out_dtype).itemsize),
    )

    return pl.pallas_call(
        _linear_kernel,
        out_shape=jax.ShapeDtypeStruct((B, D_out), out_dtype),
        grid_spec=pltpu.PrefetchScalarGridSpec(
            num_scalar_prefetch=0,
            # N outer / M middle / K inner: when B <= tm_max (ni == 1) the
            # dominant weight stream is read exactly once per call; only the
            # small activation stream is re-fetched per N block.
            grid=(nj, ni, nk),
            in_specs=[
                pl.BlockSpec((tm, tk), lambda j, i, k: (i, k)),   # x tile
                pl.BlockSpec((tn, tk), lambda j, i, k: (j, k)),   # W tile [out, in]
                pl.BlockSpec((1, tn), lambda j, i, k: (0, j)),    # bias tile
            ],
            out_specs=pl.BlockSpec((tm, tn), lambda j, i, k: (i, j)),
            scratch_shapes=[pltpu.VMEM((tm, tn), jnp.float32)],
        ),
        compiler_params=pltpu.CompilerParams(
            # N and M independent (megacore-shardable); K is the reduction.
            dimension_semantics=("parallel", "parallel", "arbitrary")),
        cost_estimate=cost,
    )(x_c, weight_c, bias2d)


if __name__ == "__main__":
    key = jax.random.PRNGKey(0)
    kx, kw, kb, kx2, kw2, kb2 = jax.random.split(key, 6)

    # --- Small shapes consistent with the module: input_shape=32, hidden=64 ---
    batch, input_shape, hidden_size = 8, 32, 64
    bound = 1.0 / (input_shape ** 0.5)
    weight = jax.random.uniform(kw, (hidden_size, input_shape),
                                jnp.float32, -bound, bound)
    bias = jax.random.uniform(kb, (hidden_size,), jnp.float32, -bound, bound)
    x = jax.random.normal(kx, (batch, input_shape), jnp.float32)

    w_c, b2 = prepare_decoder_params(weight, bias)      # one-time prep
    y = multimodal_decoder(x, w_c, b2)
    jax.block_until_ready(y)

    y_ref = x @ weight.T + bias
    assert y.shape == (batch, hidden_size)
    assert y.dtype == x.dtype
    # bf16 MXU inputs -> loose tolerance vs. the f32 reference.
    assert jnp.allclose(y, y_ref, atol=3e-2, rtol=3e-2), \
        float(jnp.max(jnp.abs(y - y_ref)))

    # --- Second check: ragged M/N tiles + real K reduction axis (nk=3) ---
    B2, D_in2, D_out2 = 272, 384, 640
    bound2 = 1.0 / (D_in2 ** 0.5)
    weight2 = jax.random.uniform(kw2, (D_out2, D_in2), jnp.float32,
                                 -bound2, bound2)
    bias2 = jax.random.uniform(kb2, (D_out2,), jnp.float32, -bound2, bound2)
    x2 = jax.random.normal(kx2, (B2, D_in2), jnp.float32)

    w2_c, b2_2 = prepare_decoder_params(weight2, bias2)
    y2 = multimodal_decoder(x2, w2_c, b2_2, tk_max=128)  # force K tiling
    jax.block_until_ready(y2)

    y2_ref = x2 @ weight2.T + bias2
    assert y2.shape == (B2, D_out2)
    assert jnp.allclose(y2, y2_ref, atol=5e-2, rtol=5e-2), \
        float(jnp.max(jnp.abs(y2 - y2_ref)))

    print("KERNEL_OK")
</pallas_src>

<mosaic_0001>
module attributes {stable_mosaic.version = 11 : i64} {
  func.func @_linear_kernel(%arg0: i32, %arg1: i32, %arg2: i32, %arg3: memref<8x32xbf16, #tpu.memory_space<vmem>>, %arg4: memref<64x32xbf16, #tpu.memory_space<vmem>>, %arg5: memref<1x64xf32, #tpu.memory_space<vmem>>, %arg6: memref<8x64xf32, #tpu.memory_space<vmem>>, %arg7: memref<8x64xf32, #tpu.memory_space<vmem>>) attributes {dimension_semantics = [#tpu.dimension_semantics<parallel>, #tpu.dimension_semantics<parallel>, #tpu.dimension_semantics<arbitrary>], iteration_bounds = array<i64: 1, 1, 1>, scalar_prefetch = 0 : i64, scratch_operands = 1 : i64, tpu.core_type = #tpu.core_type<tc>, window_params = [{transform_indices = @transform_0, window_bounds = array<i64: 8, 32>}, {transform_indices = @transform_1, window_bounds = array<i64: 64, 32>}, {transform_indices = @transform_2, window_bounds = array<i64: 1, 64>}, {transform_indices = @transform_3, window_bounds = array<i64: 8, 64>}]} {
    %c0_i32 = arith.constant 0 : i32
    %0 = arith.cmpi eq, %arg2, %c0_i32 : i32
    %1 = arith.extui %0 : i1 to i32
    %c0_i32_0 = arith.constant 0 : i32
    %2 = arith.cmpi ne, %1, %c0_i32_0 : i32
    scf.if %2 {
      %cst_10 = arith.constant 0.000000e+00 : f32
      %12 = vector.broadcast %cst_10 : f32 to vector<8x64xf32>
      %c0_11 = arith.constant 0 : index
      %c0_12 = arith.constant 0 : index
      %13 = vector.load %arg7[%c0_11, %c0_12] : memref<8x64xf32, #tpu.memory_space<vmem>>, vector<8x64xf32>
      tpu.vector_store %arg7[%c0_11, %c0_12], %12 {strides = array<i32>} : memref<8x64xf32, #tpu.memory_space<vmem>>, vector<8x64xf32>,
    } else {
    }
    %c0 = arith.constant 0 : index
    %c0_1 = arith.constant 0 : index
    %3 = vector.load %arg7[%c0, %c0_1] : memref<8x64xf32, #tpu.memory_space<vmem>>, vector<8x64xf32>
    %c0_2 = arith.constant 0 : index
    %c0_3 = arith.constant 0 : index
    %4 = vector.load %arg3[%c0_2, %c0_3] : memref<8x32xbf16, #tpu.memory_space<vmem>>, vector<8x32xbf16>
    %c0_4 = arith.constant 0 : index
    %c0_5 = arith.constant 0 : index
    %5 = vector.load %arg4[%c0_4, %c0_5] : memref<64x32xbf16, #tpu.memory_space<vmem>>, vector<64x32xbf16>
    %cst = arith.constant dense<0.000000e+00> : vector<8x64xf32>
    %6 = tpu.matmul %4, %5, %cst {dimension_numbers = #tpu.dot_dimension_numbers<[1], [1], [0], [0], [0, 0, 1, 0], [], []>} : vector<8x32xbf16>, vector<64x32xbf16>, vector<8x64xf32> -> vector<8x64xf32>
    %7 = arith.addf %3, %6 : vector<8x64xf32>
    %c0_6 = arith.constant 0 : index
    %c0_7 = arith.constant 0 : index
    %8 = vector.load %arg7[%c0_6, %c0_7] : memref<8x64xf32, #tpu.memory_space<vmem>>, vector<8x64xf32>
    tpu.vector_store %arg7[%c0_6, %c0_7], %7 {strides = array<i32>} : memref<8x64xf32, #tpu.memory_space<vmem>>, vector<8x64xf32>,
    %c0_i32_8 = arith.constant 0 : i32
    %9 = arith.cmpi eq, %arg2, %c0_i32_8 : i32
    %10 = arith.extui %9 : i1 to i32
    %c0_i32_9 = arith.constant 0 : i32
    %11 = arith.cmpi ne, %10, %c0_i32_9 : i32
    scf.if %11 {
      %c0_10 = arith.constant 0 : index
      %c0_11 = arith.constant 0 : index
      %12 = vector.load %arg7[%c0_10, %c0_11] : memref<8x64xf32, #tpu.memory_space<vmem>>, vector<8x64xf32>
      %c0_12 = arith.constant 0 : index
      %c0_13 = arith.constant 0 : index
      %13 = vector.load %arg5[%c0_12, %c0_13] : memref<1x64xf32, #tpu.memory_space<vmem>>, vector<1x64xf32>
      %14 = vector.broadcast %13 : vector<1x64xf32> to vector<8x64xf32>
      %15 = arith.addf %12, %14 : vector<8x64xf32>
      %c0_14 = arith.constant 0 : index
      %c0_15 = arith.constant 0 : index
      %16 = vector.load %arg6[%c0_14, %c0_15] : memref<8x64xf32, #tpu.memory_space<vmem>>, vector<8x64xf32>
      tpu.vector_store %arg6[%c0_14, %c0_15], %15 {strides = array<i32>} : memref<8x64xf32, #tpu.memory_space<vmem>>, vector<8x64xf32>,
    } else {
    }
    return
  }
  func.func @transform_0(%arg0: i32, %arg1: i32, %arg2: i32) -> (i32, i32) {
    %c0_i32 = arith.constant 0 : i32
    return %arg1, %arg2 : i32, i32
  }
  func.func @transform_1(%arg0: i32, %arg1: i32, %arg2: i32) -> (i32, i32) {
    %c0_i32 = arith.constant 0 : i32
    return %arg0, %arg2 : i32, i32
  }
  func.func @transform_2(%arg0: i32, %arg1: i32, %arg2: i32) -> (i32, i32) {
    %c0_i32 = arith.constant 0 : i32
    %c0_i32_0 = arith.constant 0 : i32
    return %c0_i32, %arg0 : i32, i32
  }
  func.func @transform_3(%arg0: i32, %arg1: i32, %arg2: i32) -> (i32, i32) {
    %c0_i32 = arith.constant 0 : i32
    return %arg1, %arg0 : i32, i32
  }
}

</mosaic_0001>

<llo_original>
// kernel: tpu_custom_call.1
$region0: #{tpu_custom_call.1}
  #allocation0 [shape = 'u32[]', space=smem, size = 0x4, offset = 0x4, fixed_abs, tag = 'smem constant byte address 0x4 - core index']
  #allocation1 [shape = 'u32[144,128]{1,0:T(1,128)}', space=vmem, size = 0x12000, scoped, tag = 'internal scratch']
  #allocation2 [shape = 'f32[8,64]{1,0:T(8,128)}', space=vmem, size = 0x1000, scoped, tag = 'scratch operand']
  %s0 = inlined_call_operand.vmem [shape: bf16[8,32], index: 0, kind: input, shape index: {}]
  %s1 = inlined_call_operand.vmem [shape: bf16[64,32], index: 1, kind: input, shape index: {}]
  %s2 = inlined_call_operand.vmem [shape: f32[1,64], index: 2, kind: input, shape index: {}]
  %s3 = inlined_call_operand.hbm [shape: f32[8,64], index: 3, kind: output, shape index: {}]
  %s4 = sld [smem:[#allocation0]]
  $region30: #{tpu_custom_call.1} parent=0
    _
  %s6 = ssub.s32 1, %s4
  %s7 = scalar_select 0, %s6, %s4
  $region1: #{tpu_custom_call.1} parent=0
    #allocation3 [shape = 'u8[4096]{0}', space=vmem, size = 0x1000, scoped, tag = 'output window, operand 0, single buffered']
    #allocation4 [shape = 's32[1]{0}', space=sflag, size = 0x4, scoped, tag = 'scoped memory for tpu_custom_call.1']
    %8 = vsyncpa [#allocation4], 0
    // Predicated region
    $region2: #{tpu_custom_call.1} parent=1 // pred_check
      _
    $region3: #{tpu_custom_call.1} parent=1 // pred_check_branch
      %10 = sbr.rel (0) target = $region5
    $region4: #{tpu_custom_call.1} parent=1 // pred_region
      _
    $region5: #{tpu_custom_call.1} parent=1 // pred_fallthru
      _
    // Predicated region
    $region6: #{tpu_custom_call.1} parent=1 // pred_check
      _
    $region7: #{tpu_custom_call.1} parent=1 // pred_check_branch
      %12 = sbr.rel (0) target = $region9
    $region8: #{tpu_custom_call.1} parent=1 // pred_region
      _
    $region9: #{tpu_custom_call.1} parent=1 // pred_fallthru
      _
    // Predicated region
    $region10: #{tpu_custom_call.1} parent=1 // pred_check
      _
    $region11: #{tpu_custom_call.1} parent=1 // pred_check_branch
      %14 = sbr.rel (0) target = $region13
    $region12: #{tpu_custom_call.1} parent=1 // pred_region
      _
    $region13: #{tpu_custom_call.1} parent=1 // pred_fallthru
      _
    %p16 = scmp.eq.s32.totalorder 0, 0
    // Predicated region
    $region14: #{tpu_custom_call.1} parent=1 // pred_check
      %p17 = pneg %p16
    $region15: #{tpu_custom_call.1} parent=1 // pred_check_branch
      %19 = sbr.rel (%p17) target = $region17
    $region16: #{tpu_custom_call.1} parent=1 // pred_region
      %vm20 = vcmask 523264
      %21 = vst.msk [vmem:[#allocation2] sm:$0xff] %vm20, 0.0
    $region17: #{tpu_custom_call.1} parent=1 // pred_fallthru
      _
    %v22 = vld [vmem:[#allocation2] sm:$0xff]
    %v23 = vld [vmem:[%s0] sm:$0xf]
    %v24 = vld [vmem:[%s1] sm:$0xf]
    %v25 = vld [vmem:[%s1 + $0x4] sm:$0xf]
    %v26 = vld [vmem:[%s1 + $0x8] sm:$0xf]
    %v27 = vld [vmem:[%s1 + $0xc] sm:$0xf]
    %v28 = vld [vmem:[%s1 + $0x10] sm:$0xf]
    %v29 = vld [vmem:[%s1 + $0x14] sm:$0xf]
    %v30 = vld [vmem:[%s1 + $0x18] sm:$0xf]
    %v31 = vld [vmem:[%s1 + $0x1c] sm:$0xf]
    %v40 = vunpack.c.l.b16 %v24
    %v41 = vunpack.c.l.b16 %v25
    %v42 = vunpack.c.l.b16 %v26
    %v43 = vunpack.c.l.b16 %v27
    %v44 = vunpack.c.l.b16 %v28
    %v45 = vunpack.c.l.b16 %v29
    %v46 = vunpack.c.l.b16 %v30
    %v47 = vunpack.c.l.b16 %v31
    %v48 = vpack.c.b16 %v41, %v40
    %v49 = vpack.c.b16 %v43, %v42
    %v50 = vpack.c.b16 %v45, %v44
    %v51 = vpack.c.b16 %v47, %v46
    %vm52 = vcmask 261120
    %v54 = vsel %vm52, %v23, 0
    %v57 = vsel %vm52, %v48, 0
    %v60 = vsel %vm52, %v49, 0
    %v63 = vsel %vm52, %v50, 0
    %v66 = vsel %vm52, %v51, 0
    %68 = vmatprep.subr.bf16.mxu0 0
    %69 = vmatpush1.bf16.xpose.msra.mxu0 %v57
    %70 = vmatprep.subr.bf16.mxu0 0
    %71 = vmatpush1.bf16.xpose.msra.mxu0 %v60
    %72 = vmatprep.subr.bf16.mxu0 0
    %73 = vmatpush1.bf16.xpose.msra.mxu0 %v63
    %74 = vmatprep.subr.bf16.mxu0 0
    %75 = vmatpush1.bf16.xpose.msra.mxu0 %v66
    %76 = vmatprep.subr.bf16.mxu0 0
    %77 = vmatpush1.bf16.xpose.msra.mxu0 0
    %78 = vmatprep.subr.bf16.mxu0 0
    %79 = vmatpush1.bf16.xpose.msra.mxu0 0
    %80 = vmatprep.subr.bf16.mxu0 0
    %81 = vmatpush1.bf16.xpose.msra.mxu0 0
    %82 = vmatprep.subr.bf16.mxu0 0
    %83 = vmatpush1.bf16.xpose.msra.mxu0 0
    %84 = vmatprep.subr.bf16.mxu0 0
    %85 = vmatpush1.bf16.xpose.msra.mxu0 0
    %86 = vmatprep.subr.bf16.mxu0 0
    %87 = vmatpush1.bf16.xpose.msra.mxu0 0
    %88 = vmatprep.subr.bf16.mxu0 0
    %89 = vmatpush1.bf16.xpose.msra.mxu0 0
    %90 = vmatprep.subr.bf16.mxu0 0
    %91 = vmatpush1.bf16.xpose.msra.mxu0 0
    %92 = vmatprep.subr.bf16.mxu0 0
    %93 = vmatpush1.bf16.xpose.msra.mxu0 0
    %94 = vmatprep.subr.bf16.mxu0 0
    %95 = vmatpush1.bf16.xpose.msra.mxu0 0
    %96 = vmatprep.subr.bf16.mxu0 0
    %97 = vmatpush1.bf16.xpose.msra.mxu0 0
    %98 = vmatprep.subr.bf16.mxu0 0
    %99 = vmatpush1.bf16.xpose.msra.mxu0 0
    %100 = vmatprep.mubr.bf16.mxu0 0
    %101 = vmatmul.mubr.bf16.gmra.mrb[0].mxu0 %v54
    %v102 = vpop.f32.mrb[0].mxu0
    %v103 = vadd.f32 0.0, %v102
    %v104 = vpop.f32.mrb[0].mxu0
    %v105 = vpop.f32.mrb[0].mxu0
    %v106 = vpop.f32.mrb[0].mxu0
    %107 = vdwg.mxu0
    %v108 = vadd.f32 %v22, %v103
    %vm109 = vcmask 523264
    %110 = vst.msk [vmem:[#allocation2] sm:$0xff] %vm109, %v108
    // Predicated region
    $region18: #{tpu_custom_call.1} parent=1 // pred_check
      %p111 = pneg %p16
    $region19: #{tpu_custom_call.1} parent=1 // pred_check_branch
      %113 = sbr.rel (%p111) target = $region21
    $region20: #{tpu_custom_call.1} parent=1 // pred_region
      %v114 = vld [vmem:[#allocation2] sm:$0xff]
      %v115 = vld [vmem:[%s2] sm:$0x1]
      %v117 = vlaneseq
      %v118 = vshrl.u32 %v117, 7
      %v119 = vsub.s32 0, %v118
      %v120 = vrot.slane %v115, %v119
      %v122 = vadd.f32 %v114, %v120
      %123 = vst.msk [vmem:[#allocation3] sm:$0xff] %vm109, %v122
    $region21: #{tpu_custom_call.1} parent=1 // pred_fallthru
      _
    // Predicated region
    $region22: #{tpu_custom_call.1} parent=1 // pred_check
      _
    $region23: #{tpu_custom_call.1} parent=1 // pred_check_branch
      %125 = sbr.rel (0) target = $region25
    $region24: #{tpu_custom_call.1} parent=1 // pred_region
      %s127 = ssub.s32 128, 128
      %128 = vsyncadd [#allocation4], %s127
      %s130 = sshll.u32 [#allocation3], 4
      %s131 = int_to_ptr.vmem [resolvable:$true] %s130
      %133 = dma.vmem_to_hbm [thread:$0]  %s131, 128, %s3, [#allocation4]
    $region25: #{tpu_custom_call.1} parent=1 // pred_fallthru
      _
    // Predicated region
    $region26: #{tpu_custom_call.1} parent=1 // pred_check
      _
    $region27: #{tpu_custom_call.1} parent=1 // pred_check_branch
      %135 = sbr.rel (0) target = $region29
    $region28: #{tpu_custom_call.1} parent=1 // pred_region
      %136 = dma.done [#allocation4], 128
    $region29: #{tpu_custom_call.1} parent=1 // pred_fallthru
      _
    %137 = vsyncpa [#allocation4], 1

</llo_original>
